<compile_context>
chip_gen: v7x
topology: tpu7x:2x2x1
jax: 0.10.0
libtpu: 0.0.40
codegen_flags: <defaults>
</compile_context>

<pallas_src>
import jax
import jax.numpy as jnp
from jax.experimental import pallas as pl
from jax.experimental.pallas import tpu as pltpu


def _gumbel_argmax_kernel(x_ref, w12_ref, b12_ref, w3_ref, b3_ref, out_ref):
    # x_ref: (TB, S) -- natural (batch, features) layout straight from HBM.
    x = x_ref[...]

    # Folded embedding + first pred layer: h = W12 @ x^T + b12  -> (H, TB).
    # Contraction on the shared S axis (transposed RHS) keeps batch on lanes
    # without any wrapper-side transpose copy.
    h = jax.lax.dot_general(
        w12_ref[...], x,
        dimension_numbers=(((1,), (1,)), ((), ())),
        preferred_element_type=jnp.float32) + b12_ref[...]
    h = jnp.maximum(h, 0.0)

    # pred_layer[2]: Linear(hidden -> sample_num): (S, TB).
    pred = jnp.dot(w3_ref[...], h,
                   preferred_element_type=jnp.float32) + b3_ref[...]

    # argmax over the feature (sublane) axis; first occurrence on ties,
    # matching jnp.argmax / torch.argmax.  Result is a lane-dense (1, TB) row.
    S = pred.shape[0]
    col_max = jnp.max(pred, axis=0, keepdims=True)                      # (1, TB)
    sub_idx = jax.lax.broadcasted_iota(jnp.int32, pred.shape, dimension=0)
    cand = jnp.where(pred == col_max, sub_idx, jnp.int32(S))
    out_ref[...] = jnp.min(cand, axis=0, keepdims=True)                 # (1, TB)


def _pick_tile(B, tile_b):
    """Batch tile (always a multiple of 128 for the lane-dense output)."""
    if B > tile_b:
        return tile_b
    if B >= 256:
        # Split into (at least) two tiles so v7x megacore shards the batch axis.
        return pl.cdiv(pl.cdiv(B, 2), 128) * 128
    return 128


def gumbel_forward(sample, params, *, tile_b=8192):
    """sample: (B, sample_num) float32 -> (B,) int32 argmax indices."""
    w1, b1, w2, b2, w3, b3 = params
    B, S = sample.shape
    H = w1.shape[0]

    # Exact fold of the two bias-only Linear layers (no nonlinearity between).
    w12 = jnp.dot(w2, w1)            # (H, S)
    b12 = jnp.dot(w2, b1) + b2       # (H, 1)

    TB = _pick_tile(B, tile_b)
    num_tiles = pl.cdiv(B, TB)
    B_pad = num_tiles * TB           # only the output is padded; input stays (B, S)

    flops = 4 * B_pad * S * H        # two matmuls per padded batch element
    bytes_accessed = 4 * (B * S + w12.size + b12.size + w3.size + b3.size + B_pad)
    cost = pl.CostEstimate(flops=flops, transcendentals=0,
                           bytes_accessed=bytes_accessed)

    out = pl.pallas_call(
        _gumbel_argmax_kernel,
        out_shape=jax.ShapeDtypeStruct((1, B_pad), jnp.int32),
        grid=(num_tiles,),
        in_specs=[
            pl.BlockSpec((TB, S), lambda i: (i, 0)),   # streamed activations (ragged last block OK)
            pl.BlockSpec((H, S), lambda i: (0, 0)),    # VMEM-resident folded weights
            pl.BlockSpec((H, 1), lambda i: (0, 0)),
            pl.BlockSpec((S, H), lambda i: (0, 0)),
            pl.BlockSpec((S, 1), lambda i: (0, 0)),
        ],
        out_specs=pl.BlockSpec((1, TB), lambda i: (0, i)),   # lane-dense store
        compiler_params=pltpu.CompilerParams(
            dimension_semantics=("parallel",)),
        cost_estimate=cost,
    )(sample, w12, b12, w3, b3)

    return out[0, :B]


def init_params(key, sample_num, hidden_size):
    """Deterministic synthetic parameters in PyTorch nn.Linear layout
    (weight: (out_features, in_features)); biases kept 2-D as (out, 1)."""
    ks = jax.random.split(key, 6)

    def lin(kw, kb, fan_in, fan_out):
        bound = 1.0 / jnp.sqrt(fan_in)
        w = jax.random.uniform(kw, (fan_out, fan_in), jnp.float32, -bound, bound)
        b = jax.random.uniform(kb, (fan_out, 1), jnp.float32, -bound, bound)
        return w, b

    w1, b1 = lin(ks[0], ks[1], sample_num, hidden_size)
    w2, b2 = lin(ks[2], ks[3], hidden_size, hidden_size)
    w3, b3 = lin(ks[4], ks[5], hidden_size, sample_num)
    return (w1, b1, w2, b2, w3, b3)


if __name__ == "__main__":
    # TODO(synk): is_train=True branches (Softmax / GumbelSoftmax with host-side
    # Counter-based rep-penalize resampling) are not part of the default forward
    # and are omitted.
    key = jax.random.PRNGKey(0)
    k_x, k_p = jax.random.split(key)

    sample_num = 16
    hidden_size = 32
    batch = 8

    params = init_params(k_p, sample_num, hidden_size)
    sample = jax.random.normal(k_x, (batch, sample_num), jnp.float32)

    out = gumbel_forward(sample, params)
    out = jax.block_until_ready(out)

    # Cross-check against plain (unfolded) JAX reference.
    w1, b1, w2, b2, w3, b3 = params
    h = sample @ w1.T + b1[:, 0]
    h = jnp.maximum(h @ w2.T + b2[:, 0], 0.0)
    pred = h @ w3.T + b3[:, 0]
    ref = jnp.argmax(pred, axis=-1).astype(jnp.int32)
    assert out.shape == (batch,)
    assert bool(jnp.all(out == ref))
    print("KERNEL_OK")
</pallas_src>

<mosaic_0001>
module attributes {stable_mosaic.version = 11 : i64} {
  func.func @_gumbel_argmax_kernel(%arg0: i32, %arg1: memref<128x16xf32, #tpu.memory_space<vmem>>, %arg2: memref<32x16xf32, #tpu.memory_space<vmem>>, %arg3: memref<32x1xf32, #tpu.memory_space<vmem>>, %arg4: memref<16x32xf32, #tpu.memory_space<vmem>>, %arg5: memref<16x1xf32, #tpu.memory_space<vmem>>, %arg6: memref<1x128xi32, #tpu.memory_space<vmem>>) attributes {dimension_semantics = [#tpu.dimension_semantics<parallel>], iteration_bounds = array<i64: 1>, scalar_prefetch = 0 : i64, scratch_operands = 0 : i64, tpu.core_type = #tpu.core_type<tc>, window_params = [{transform_indices = @transform_0, window_bounds = array<i64: 128, 16>}, {pipeline_mode = #tpu.pipeline_mode<synchronous>, transform_indices = @transform_1, window_bounds = array<i64: 32, 16>}, {pipeline_mode = #tpu.pipeline_mode<synchronous>, transform_indices = @transform_2, window_bounds = array<i64: 32, 1>}, {pipeline_mode = #tpu.pipeline_mode<synchronous>, transform_indices = @transform_3, window_bounds = array<i64: 16, 32>}, {pipeline_mode = #tpu.pipeline_mode<synchronous>, transform_indices = @transform_4, window_bounds = array<i64: 16, 1>}, {transform_indices = @transform_5, window_bounds = array<i64: 1, 128>}]} {
    %c0 = arith.constant 0 : index
    %c0_0 = arith.constant 0 : index
    %0 = vector.load %arg1[%c0, %c0_0] : memref<128x16xf32, #tpu.memory_space<vmem>>, vector<128x16xf32>
    %c0_1 = arith.constant 0 : index
    %c0_2 = arith.constant 0 : index
    %1 = vector.load %arg2[%c0_1, %c0_2] : memref<32x16xf32, #tpu.memory_space<vmem>>, vector<32x16xf32>
    %cst = arith.constant dense<0.000000e+00> : vector<32x128xf32>
    %2 = tpu.matmul %1, %0, %cst {dimension_numbers = #tpu.dot_dimension_numbers<[1], [1], [0], [0], [0, 0, 1, 0], [], []>} : vector<32x16xf32>, vector<128x16xf32>, vector<32x128xf32> -> vector<32x128xf32>
    %c0_3 = arith.constant 0 : index
    %c0_4 = arith.constant 0 : index
    %3 = vector.load %arg3[%c0_3, %c0_4] : memref<32x1xf32, #tpu.memory_space<vmem>>, vector<32x1xf32>
    %4 = vector.broadcast %3 : vector<32x1xf32> to vector<32x128xf32>
    %5 = arith.addf %2, %4 : vector<32x128xf32>
    %cst_5 = arith.constant 0.000000e+00 : f32
    %6 = vector.broadcast %cst_5 : f32 to vector<32x128xf32>
    %7 = arith.maximumf %5, %6 : vector<32x128xf32>
    %c0_6 = arith.constant 0 : index
    %c0_7 = arith.constant 0 : index
    %8 = vector.load %arg4[%c0_6, %c0_7] : memref<16x32xf32, #tpu.memory_space<vmem>>, vector<16x32xf32>
    %cst_8 = arith.constant dense<0.000000e+00> : vector<16x128xf32>
    %9 = tpu.matmul %8, %7, %cst_8 {dimension_numbers = #tpu.dot_dimension_numbers<[1], [0], [0], [1], [0, 0, 1, 1], [], []>} : vector<16x32xf32>, vector<32x128xf32>, vector<16x128xf32> -> vector<16x128xf32>
    %c0_9 = arith.constant 0 : index
    %c0_10 = arith.constant 0 : index
    %10 = vector.load %arg5[%c0_9, %c0_10] : memref<16x1xf32, #tpu.memory_space<vmem>>, vector<16x1xf32>
    %11 = vector.broadcast %10 : vector<16x1xf32> to vector<16x128xf32>
    %12 = arith.addf %9, %11 : vector<16x128xf32>
    %cst_11 = arith.constant dense<0xFF800000> : vector<128xf32>
    %13 = vector.multi_reduction <maximumf>, %12, %cst_11 [0] : vector<16x128xf32> to vector<128xf32>
    %14 = vector.shape_cast %13 : vector<128xf32> to vector<1x128xf32>
    %15 = tpu.iota {dimensions = array<i32: 0>} : vector<16x128xi32>
    %16 = vector.broadcast %14 : vector<1x128xf32> to vector<16x128xf32>
    %17 = arith.cmpf oeq, %12, %16 : vector<16x128xf32>
    %c16_i32 = arith.constant 16 : i32
    %18 = vector.broadcast %c16_i32 : i32 to vector<16x128xi32>
    %19 = arith.select %17, %15, %18 : vector<16x128xi1>, vector<16x128xi32>
    %cst_12 = arith.constant dense<2147483647> : vector<128xi32>
    %20 = vector.multi_reduction <minsi>, %19, %cst_12 [0] : vector<16x128xi32> to vector<128xi32>
    %21 = vector.shape_cast %20 : vector<128xi32> to vector<1x128xi32>
    %c0_13 = arith.constant 0 : index
    %c0_14 = arith.constant 0 : index
    %22 = vector.load %arg6[%c0_13, %c0_14] : memref<1x128xi32, #tpu.memory_space<vmem>>, vector<1x128xi32>
    tpu.vector_store %arg6[%c0_13, %c0_14], %21 {strides = array<i32>} : memref<1x128xi32, #tpu.memory_space<vmem>>, vector<1x128xi32>,
    return
  }
  func.func @transform_0(%arg0: i32) -> (i32, i32) {
    %c0_i32 = arith.constant 0 : i32
    %c0_i32_0 = arith.constant 0 : i32
    return %arg0, %c0_i32 : i32, i32
  }
  func.func @transform_1(%arg0: i32) -> (i32, i32) {
    %c0_i32 = arith.constant 0 : i32
    %c0_i32_0 = arith.constant 0 : i32
    %c0_i32_1 = arith.constant 0 : i32
    return %c0_i32, %c0_i32_0 : i32, i32
  }
  func.func @transform_2(%arg0: i32) -> (i32, i32) {
    %c0_i32 = arith.constant 0 : i32
    %c0_i32_0 = arith.constant 0 : i32
    %c0_i32_1 = arith.constant 0 : i32
    return %c0_i32, %c0_i32_0 : i32, i32
  }
  func.func @transform_3(%arg0: i32) -> (i32, i32) {
    %c0_i32 = arith.constant 0 : i32
    %c0_i32_0 = arith.constant 0 : i32
    %c0_i32_1 = arith.constant 0 : i32
    return %c0_i32, %c0_i32_0 : i32, i32
  }
  func.func @transform_4(%arg0: i32) -> (i32, i32) {
    %c0_i32 = arith.constant 0 : i32
    %c0_i32_0 = arith.constant 0 : i32
    %c0_i32_1 = arith.constant 0 : i32
    return %c0_i32, %c0_i32_0 : i32, i32
  }
  func.func @transform_5(%arg0: i32) -> (i32, i32) {
    %c0_i32 = arith.constant 0 : i32
    %c0_i32_0 = arith.constant 0 : i32
    return %c0_i32, %arg0 : i32, i32
  }
}

</mosaic_0001>

<llo_original>
// kernel: tpu_custom_call.1
$region0: #{tpu_custom_call.1}
  #allocation0 [shape = 'u32[]', space=smem, size = 0x4, offset = 0x4, fixed_abs, tag = 'smem constant byte address 0x4 - core index']
  #allocation1 [shape = 'u32[144,128]{1,0:T(1,128)}', space=vmem, size = 0x12000, scoped, tag = 'internal scratch']
  %s0 = inlined_call_operand.vmem [shape: f32[8,16], index: 0, kind: input, shape index: {}]
  %s1 = inlined_call_operand.vmem [shape: f32[32,16], index: 1, kind: input, shape index: {}]
  %s2 = inlined_call_operand.vmem [shape: f32[32,1], index: 2, kind: input, shape index: {}]
  %s3 = inlined_call_operand.vmem [shape: f32[16,32], index: 3, kind: input, shape index: {}]
  %s4 = inlined_call_operand.vmem [shape: f32[16,1], index: 4, kind: input, shape index: {}]
  %s5 = inlined_call_operand.hbm [shape: s32[1,128], index: 5, kind: output, shape index: {}]
  %s6 = sld [smem:[#allocation0]]
  $region30: #{tpu_custom_call.1} parent=0
    _
  %s8 = ssub.s32 1, %s6
  %s9 = scalar_select 0, %s8, %s6
  $region1: #{tpu_custom_call.1} parent=0
    #allocation2 [shape = 'u8[512]{0}', space=vmem, size = 0x400, scoped, tag = 'output window, operand 0, single buffered']
    #allocation3 [shape = 's32[1]{0}', space=sflag, size = 0x4, scoped, tag = 'scoped memory for tpu_custom_call.1']
    %10 = vsyncpa [#allocation3], 0
    // Predicated region
    $region2: #{tpu_custom_call.1} parent=1 // pred_check
      _
    $region3: #{tpu_custom_call.1} parent=1 // pred_check_branch
      %12 = sbr.rel (0) target = $region5
    $region4: #{tpu_custom_call.1} parent=1 // pred_region
      _
    $region5: #{tpu_custom_call.1} parent=1 // pred_fallthru
      _
    // Predicated region
    $region6: #{tpu_custom_call.1} parent=1 // pred_check
      _
    $region7: #{tpu_custom_call.1} parent=1 // pred_check_branch
      %14 = sbr.rel (0) target = $region9
    $region8: #{tpu_custom_call.1} parent=1 // pred_region
      _
    $region9: #{tpu_custom_call.1} parent=1 // pred_fallthru
      _
    // Predicated region
    $region10: #{tpu_custom_call.1} parent=1 // pred_check
      _
    $region11: #{tpu_custom_call.1} parent=1 // pred_check_branch
      %16 = sbr.rel (0) target = $region13
    $region12: #{tpu_custom_call.1} parent=1 // pred_region
      _
    $region13: #{tpu_custom_call.1} parent=1 // pred_fallthru
      _
    // Predicated region
    $region14: #{tpu_custom_call.1} parent=1 // pred_check
      _
    $region15: #{tpu_custom_call.1} parent=1 // pred_check_branch
      %18 = sbr.rel (0) target = $region17
    $region16: #{tpu_custom_call.1} parent=1 // pred_region
      _
    $region17: #{tpu_custom_call.1} parent=1 // pred_fallthru
      _
    // Predicated region
    $region18: #{tpu_custom_call.1} parent=1 // pred_check
      _
    $region19: #{tpu_custom_call.1} parent=1 // pred_check_branch
      %20 = sbr.rel (0) target = $region21
    $region20: #{tpu_custom_call.1} parent=1 // pred_region
      _
    $region21: #{tpu_custom_call.1} parent=1 // pred_fallthru
      _
    %v21 = vld [vmem:[%s0] sm:$0xff]
    %v22 = vld [vmem:[%s0 + $0x8] sm:$0xff]
    %v23 = vld [vmem:[%s0 + $0x10] sm:$0xff]
    %v24 = vld [vmem:[%s0 + $0x18] sm:$0xff]
    %v25 = vld [vmem:[%s0 + $0x20] sm:$0xff]
    %v26 = vld [vmem:[%s0 + $0x28] sm:$0xff]
    %v27 = vld [vmem:[%s0 + $0x30] sm:$0xff]
    %v28 = vld [vmem:[%s0 + $0x38] sm:$0xff]
    %v29 = vld [vmem:[%s0 + $0x40] sm:$0xff]
    %v30 = vld [vmem:[%s0 + $0x48] sm:$0xff]
    %v31 = vld [vmem:[%s0 + $0x50] sm:$0xff]
    %v32 = vld [vmem:[%s0 + $0x58] sm:$0xff]
    %v33 = vld [vmem:[%s0 + $0x60] sm:$0xff]
    %v34 = vld [vmem:[%s0 + $0x68] sm:$0xff]
    %v35 = vld [vmem:[%s0 + $0x70] sm:$0xff]
    %v36 = vld [vmem:[%s0 + $0x78] sm:$0xff]
    %v37 = vld [vmem:[%s1] sm:$0xff]
    %v38 = vld [vmem:[%s1 + $0x8] sm:$0xff]
    %v39 = vld [vmem:[%s1 + $0x10] sm:$0xff]
    %v40 = vld [vmem:[%s1 + $0x18] sm:$0xff]
    %v41 = vld [vmem:[%s2] sm:$0xff]
    %v42 = vld [vmem:[%s2 + $0x8] sm:$0xff]
    %v43 = vld [vmem:[%s2 + $0x10] sm:$0xff]
    %v44 = vld [vmem:[%s2 + $0x18] sm:$0xff]
    %46 = vset.pattern.permute.xlu0 0
    %47 = vperm.xlu0 %46, %v41
    %v48 = vpop.permute.xlu0 %47
    %51 = vset.pattern.permute.xlu0 0
    %52 = vperm.xlu0 %51, %v42
    %v53 = vpop.permute.xlu0 %52
    %56 = vset.pattern.permute.xlu0 0
    %57 = vperm.xlu0 %56, %v43
    %v58 = vpop.permute.xlu0 %57
    %61 = vset.pattern.permute.xlu0 0
    %62 = vperm.xlu0 %61, %v44
    %v63 = vpop.permute.xlu0 %62
    %vm65 = vcmask 130048
    %v67 = vsel %vm65, %v37, 0
    %v70 = vsel %vm65, %v38, 0
    %v73 = vsel %vm65, %v39, 0
    %v76 = vsel %vm65, %v40, 0
    %v79 = vsel %vm65, %v21, 0
    %v82 = vsel %vm65, %v22, 0
    %v85 = vsel %vm65, %v23, 0
    %v88 = vsel %vm65, %v24, 0
    %v91 = vsel %vm65, %v25, 0
    %v94 = vsel %vm65, %v26, 0
    %v97 = vsel %vm65, %v27, 0
    %v100 = vsel %vm65, %v28, 0
    %v103 = vsel %vm65, %v29, 0
    %v106 = vsel %vm65, %v30, 0
    %v109 = vsel %vm65, %v31, 0
    %v112 = vsel %vm65, %v32, 0
    %v115 = vsel %vm65, %v33, 0
    %v118 = vsel %vm65, %v34, 0
    %v121 = vsel %vm65, %v35, 0
    %v124 = vsel %vm65, %v36, 0
    %126 = vmatprep.subr.mxu0 0.0
    %127 = vmatpush1.xpose.msra.mxu0 %v79
    %128 = vmatprep.subr.mxu0 0.0
    %129 = vmatpush1.xpose.msra.mxu0 %v82
    %130 = vmatprep.subr.mxu0 0.0
    %131 = vmatpush1.xpose.msra.mxu0 %v85
    %132 = vmatprep.subr.mxu0 0.0
    %133 = vmatpush1.xpose.msra.mxu0 %v88
    %134 = vmatprep.subr.mxu0 0.0
    %135 = vmatpush1.xpose.msra.mxu0 %v91
    %136 = vmatprep.subr.mxu0 0.0
    %137 = vmatpush1.xpose.msra.mxu0 %v94
    %138 = vmatprep.subr.mxu0 0.0
    %139 = vmatpush1.xpose.msra.mxu0 %v97
    %140 = vmatprep.subr.mxu0 0.0
    %141 = vmatpush1.xpose.msra.mxu0 %v100
    %142 = vmatprep.subr.mxu0 0.0
    %143 = vmatpush1.xpose.msra.mxu0 %v103
    %144 = vmatprep.subr.mxu0 0.0
    %145 = vmatpush1.xpose.msra.mxu0 %v106
    %146 = vmatprep.subr.mxu0 0.0
    %147 = vmatpush1.xpose.msra.mxu0 %v109
    %148 = vmatprep.subr.mxu0 0.0
    %149 = vmatpush1.xpose.msra.mxu0 %v112
    %150 = vmatprep.subr.mxu0 0.0
    %151 = vmatpush1.xpose.msra.mxu0 %v115
    %152 = vmatprep.subr.mxu0 0.0
    %153 = vmatpush1.xpose.msra.mxu0 %v118
    %154 = vmatprep.subr.mxu0 0.0
    %155 = vmatpush1.xpose.msra.mxu0 %v121
    %156 = vmatprep.subr.mxu0 0.0
    %157 = vmatpush1.xpose.msra.mxu0 %v124
    %158 = vmatprep.subr.mxu0 0.0
    %159 = vmatpush1.xpose.msra.mxu0 0.0
    %160 = vmatprep.subr.mxu0 0.0
    %161 = vmatpush1.xpose.msra.mxu0 0.0
    %162 = vmatprep.subr.mxu0 0.0
    %163 = vmatpush1.xpose.msra.mxu0 0.0
    %164 = vmatprep.subr.mxu0 0.0
    %165 = vmatpush1.xpose.msra.mxu0 0.0
    %166 = vmatprep.subr.mxu0 0.0
    %167 = vmatpush1.xpose.msra.mxu0 0.0
    %168 = vmatprep.subr.mxu0 0.0
    %169 = vmatpush1.xpose.msra.mxu0 0.0
    %170 = vmatprep.subr.mxu0 0.0
    %171 = vmatpush1.xpose.msra.mxu0 0.0
    %172 = vmatprep.subr.mxu0 0.0
    %173 = vmatpush1.xpose.msra.mxu0 0.0
    %174 = vmatprep.subr.mxu0 0.0
    %175 = vmatpush1.xpose.msra.mxu0 0.0
    %176 = vmatprep.subr.mxu0 0.0
    %177 = vmatpush1.xpose.msra.mxu0 0.0
    %178 = vmatprep.subr.mxu0 0.0
    %179 = vmatpush1.xpose.msra.mxu0 0.0
    %180 = vmatprep.subr.mxu0 0.0
    %181 = vmatpush1.xpose.msra.mxu0 0.0
    %182 = vmatprep.subr.mxu0 0.0
    %183 = vmatpush1.xpose.msra.mxu0 0.0
    %184 = vmatprep.subr.mxu0 0.0
    %185 = vmatpush1.xpose.msra.mxu0 0.0
    %186 = vmatprep.subr.mxu0 0.0
    %187 = vmatpush1.xpose.msra.mxu0 0.0
    %188 = vmatprep.subr.mxu0 0.0
    %189 = vmatpush1.xpose.msra.mxu0 0.0
    %190 = vmatprep.mubr.f32.mxu0 0.0
    %191 = vmatmul.mubr.f32.gmra.mrb[0].mxu0 %v67
    %v192 = vpop.f32.mrb[0].mxu0
    %v193 = vadd.f32 %v48, %v192
    %v194 = vpop.f32.mrb[0].mxu0
    %195 = vmatprep.mubr.f32.mxu0 0.0
    %196 = vmatmul.mubr.f32.gmra.mrb[0].mxu0 %v70
    %v197 = vpop.f32.mrb[0].mxu0
    %v198 = vadd.f32 %v53, %v197
    %v199 = vpop.f32.mrb[0].mxu0
    %200 = vmatprep.mubr.f32.mxu0 0.0
    %201 = vmatmul.mubr.f32.gmra.mrb[0].mxu0 %v73
    %v202 = vpop.f32.mrb[0].mxu0
    %v203 = vadd.f32 %v58, %v202
    %v204 = vpop.f32.mrb[0].mxu0
    %205 = vmatprep.mubr.f32.mxu0 0.0
    %206 = vmatmul.mubr.f32.gmra.mrb[0].mxu0 %v76
    %v207 = vpop.f32.mrb[0].mxu0
    %v208 = vadd.f32 %v63, %v207
    %v209 = vpop.f32.mrb[0].mxu0
    %210 = vdwg.mxu0
    %v211 = vmax.f32 %v193, 0.0
    %v212 = vmax.f32 %v198, 0.0
    %v213 = vmax.f32 %v203, 0.0
    %v214 = vmax.f32 %v208, 0.0
    %v215 = vld [vmem:[%s3] sm:$0xff]
    %v216 = vld [vmem:[%s3 + $0x8] sm:$0xff]
    %v217 = vld [vmem:[%s4] sm:$0xff]
    %v218 = vld [vmem:[%s4 + $0x8] sm:$0xff]
    %220 = vset.pattern.permute.xlu0 0
    %221 = vperm.xlu0 %220, %v217
    %v222 = vpop.permute.xlu0 %221
    %225 = vset.pattern.permute.xlu0 0
    %226 = vperm.xlu0 %225, %v218
    %v227 = vpop.permute.xlu0 %226
    %vm229 = vcmask 261120
    %v231 = vsel %vm229, %v215, 0
    %v234 = vsel %vm229, %v216, 0
    %236 = vmatprep.subr.mxu0 0.0
    %237 = vmatpush1.msra.mxu0 %v211
    %238 = vmatprep.subr.mxu0 0.0
    %239 = vmatpush1.msra.mxu0 %v212
    %240 = vmatprep.subr.mxu0 0.0
    %241 = vmatpush1.msra.mxu0 %v213
    %242 = vmatprep.subr.mxu0 0.0
    %243 = vmatpush1.msra.mxu0 %v214
    %244 = vmatprep.subr.mxu0 0.0
    %245 = vmatpush1.msra.mxu0 0.0
    %246 = vmatprep.subr.mxu0 0.0
    %247 = vmatpush1.msra.mxu0 0.0
    %248 = vmatprep.subr.mxu0 0.0
    %249 = vmatpush1.msra.mxu0 0.0
    %250 = vmatprep.subr.mxu0 0.0
    %251 = vmatpush1.msra.mxu0 0.0
    %252 = vmatprep.subr.mxu0 0.0
    %253 = vmatpush1.msra.mxu0 0.0
    %254 = vmatprep.subr.mxu0 0.0
    %255 = vmatpush1.msra.mxu0 0.0
    %256 = vmatprep.subr.mxu0 0.0
    %257 = vmatpush1.msra.mxu0 0.0
    %258 = vmatprep.subr.mxu0 0.0
    %259 = vmatpush1.msra.mxu0 0.0
    %260 = vmatprep.subr.mxu0 0.0
    %261 = vmatpush1.msra.mxu0 0.0
    %262 = vmatprep.subr.mxu0 0.0
    %263 = vmatpush1.msra.mxu0 0.0
    %264 = vmatprep.subr.mxu0 0.0
    %265 = vmatpush1.msra.mxu0 0.0
    %266 = vmatprep.subr.mxu0 0.0
    %267 = vmatpush1.msra.mxu0 0.0
    %268 = vmatprep.subr.mxu0 0.0
    %269 = vmatpush1.msra.mxu0 0.0
    %270 = vmatprep.subr.mxu0 0.0
    %271 = vmatpush1.msra.mxu0 0.0
    %272 = vmatprep.subr.mxu0 0.0
    %273 = vmatpush1.msra.mxu0 0.0
    %274 = vmatprep.subr.mxu0 0.0
    %275 = vmatpush1.msra.mxu0 0.0
    %276 = vmatprep.subr.mxu0 0.0
    %277 = vmatpush1.msra.mxu0 0.0
    %278 = vmatprep.subr.mxu0 0.0
    %279 = vmatpush1.msra.mxu0 0.0
    %280 = vmatprep.subr.mxu0 0.0
    %281 = vmatpush1.msra.mxu0 0.0
    %282 = vmatprep.subr.mxu0 0.0
    %283 = vmatpush1.msra.mxu0 0.0
    %284 = vmatprep.subr.mxu0 0.0
    %285 = vmatpush1.msra.mxu0 0.0
    %286 = vmatprep.subr.mxu0 0.0
    %287 = vmatpush1.msra.mxu0 0.0
    %288 = vmatprep.subr.mxu0 0.0
    %289 = vmatpush1.msra.mxu0 0.0
    %290 = vmatprep.subr.mxu0 0.0
    %291 = vmatpush1.msra.mxu0 0.0
    %292 = vmatprep.subr.mxu0 0.0
    %293 = vmatpush1.msra.mxu0 0.0
    %294 = vmatprep.subr.mxu0 0.0
    %295 = vmatpush1.msra.mxu0 0.0
    %296 = vmatprep.subr.mxu0 0.0
    %297 = vmatpush1.msra.mxu0 0.0
    %298 = vmatprep.subr.mxu0 0.0
    %299 = vmatpush1.msra.mxu0 0.0
    %300 = vmatprep.mubr.f32.mxu0 0.0
    %301 = vmatmul.mubr.f32.gmra.mrb[0].mxu0 %v231
    %v302 = vpop.f32.mrb[0].mxu0
    %v303 = vadd.f32 %v222, %v302
    %v304 = vpop.f32.mrb[0].mxu0
    %305 = vmatprep.mubr.f32.mxu0 0.0
    %306 = vmatmul.mubr.f32.gmra.mrb[0].mxu0 %v234
    %v307 = vpop.f32.mrb[0].mxu0
    %v308 = vadd.f32 %v227, %v307
    %v309 = vpop.f32.mrb[0].mxu0
    %310 = vdwg.mxu0
    %v311 = vmax.f32 %v303, %v308
    %v312 = vrot.slane %v311, 4
    %v313 = vmax.f32 %v311, %v312
    %v314 = vrot.slane %v313, 2
    %v315 = vmax.f32 %v313, %v314
    %v316 = vrot.slane %v315, 1
    %v317 = vmax.f32 %v315, %v316
    %v318 = vlaneseq
    %v319 = vshrl.u32 %v318, 7
    %v320 = vadd.s32 %v319, 8
    %vm321 = vcmp.eq.f32.partialorder %v303, %v317
    %vm322 = vcmp.eq.f32.partialorder %v308, %v317
    %v323 = vsel %vm321, %v319, 16
    %v324 = vsel %vm322, %v320, 16
    %vm325 = vcmp.lt.s32.totalorder %v323, %v324
    %v326 = vsel %vm325, %v323, %v324
    %v327 = vrot.slane %v326, 4
    %vm328 = vcmp.lt.s32.totalorder %v326, %v327
    %v329 = vsel %vm328, %v326, %v327
    %v330 = vrot.slane %v329, 2
    %vm331 = vcmp.lt.s32.totalorder %v329, %v330
    %v332 = vsel %vm331, %v329, %v330
    %v333 = vrot.slane %v332, 1
    %vm334 = vcmp.lt.s32.totalorder %v332, %v333
    %v335 = vsel %vm334, %v332, %v333
    %336 = vst [vmem:[#allocation2] sm:$0x1] %v335
    // Predicated region
    $region22: #{tpu_custom_call.1} parent=1 // pred_check
      _
    $region23: #{tpu_custom_call.1} parent=1 // pred_check_branch
      %338 = sbr.rel (0) target = $region25
    $region24: #{tpu_custom_call.1} parent=1 // pred_region
      %s340 = ssub.s32 16, 16
      %341 = vsyncadd [#allocation3], %s340
      %s343 = sshll.u32 [#allocation2], 4
      %s344 = int_to_ptr.vmem [resolvable:$true] %s343
      %346 = dma.vmem_to_hbm [thread:$0]  %s344, 16, %s5, [#allocation3]
    $region25: #{tpu_custom_call.1} parent=1 // pred_fallthru
      _
    // Predicated region
    $region26: #{tpu_custom_call.1} parent=1 // pred_check
      _
    $region27: #{tpu_custom_call.1} parent=1 // pred_check_branch
      %348 = sbr.rel (0) target = $region29
    $region28: #{tpu_custom_call.1} parent=1 // pred_region
      %349 = dma.done [#allocation3], 16
    $region29: #{tpu_custom_call.1} parent=1 // pred_fallthru
      _
    %350 = vsyncpa [#allocation3], 1

</llo_original>
